<compile_context>
chip_gen: v7x
topology: tpu7x:2x2x1
jax: 0.10.0
libtpu: 0.0.40
codegen_flags: <defaults>
</compile_context>

<pallas_src>
import jax
import jax.numpy as jnp
from jax.experimental import pallas as pl
from jax.experimental.pallas import tpu as pltpu

# ------------------------- configuration (small, matches module) ----------
BATCH = 8
INPUT_SIZE = 32
BERT_SIZE = 64
HIDDEN_SIZES = (64, 64)      # tuple -> one hidden (Linear + softplus) pair
OUTPUT_SIZE = 16
LABEL_SIZE = 0               # labels=None path
BN_EPS = 1e-5

H0, H1 = HIDDEN_SIZES
SLAB_W = H0                              # 64 lanes everywhere in the slab
HEAD_W = 2 * OUTPUT_SIZE                 # 32 valid head columns (mu ++ log_sigma)

# slab row layout (all block starts 8-sublane aligned)
_R_WX_0, _R_WX_1 = 0, INPUT_SIZE                      # W_in (x part)          (32, 64)
_R_WB_0, _R_WB_1 = _R_WX_1, _R_WX_1 + BERT_SIZE       # W_in (bert, folded)    (64, 64)
_R_W1_0, _R_W1_1 = _R_WB_1, _R_WB_1 + H0              # W1                     (64, 64)
_R_WH_0, _R_WH_1 = _R_W1_1, _R_W1_1 + H1              # W_heads, zero-padded   (64, 64)
_R_B0_0, _R_B0_1 = _R_WH_1, _R_WH_1 + 8               # b0_f replicated        ( 8, 64)
_R_B1_0, _R_B1_1 = _R_B0_1, _R_B0_1 + 8               # b1   replicated        ( 8, 64)
SLAB_ROWS = _R_B1_1                                   # 240


def _softplus(x):
    # PyTorch nn.Softplus(beta=1, threshold=20): exact linear branch above 20,
    # numerically stable form below.
    return jnp.where(x > 20.0, x, jnp.log1p(jnp.exp(-jnp.abs(x))) + jnp.maximum(x, 0.0))


def _batchnorm_train(z):
    # BatchNorm1d(affine=False), training mode: biased full-batch statistics.
    m = jnp.mean(z, axis=0, keepdims=True)
    v = jnp.mean((z - m) ** 2, axis=0, keepdims=True)
    return (z - m) * jax.lax.rsqrt(v + BN_EPS)


# --------------------------------- kernel ---------------------------------
def inference_kernel(x_ref, xb_ref, slab_ref, mu_ref, ls_ref):
    b = x_ref.shape[0]

    w_in_x = slab_ref[_R_WX_0:_R_WX_1, :]               # (32, 64)
    w_in_b = slab_ref[_R_WB_0:_R_WB_1, :]               # (64, 64)  adapt_bert folded in
    w1 = slab_ref[_R_W1_0:_R_W1_1, :]                   # (64, 64)
    w_heads = slab_ref[_R_WH_0:_R_WH_1, :]              # (64, 64), cols >= 32 are zero

    if b == 8:
        # biases are pre-replicated to 8 sublanes: plain vreg add, no broadcast.
        b0 = slab_ref[_R_B0_0:_R_B0_1, :]                # (8, 64)
        b1 = slab_ref[_R_B1_0:_R_B1_1, :]                # (8, 64)
    else:
        b0 = slab_ref[_R_B0_0:_R_B0_0 + 1, :]            # (1, 64) -> broadcast add
        b1 = slab_ref[_R_B1_0:_R_B1_0 + 1, :]

    # input_layer (with adapt_bert folded in), concat expressed as sum of two dots
    h = _softplus(
        jnp.dot(x_ref[...], w_in_x, preferred_element_type=jnp.float32)
        + jnp.dot(xb_ref[...], w_in_b, preferred_element_type=jnp.float32)
        + b0)

    # hiddens.l_0 = Linear + activation
    h = _softplus(jnp.dot(h, w1, preferred_element_type=jnp.float32) + b1)

    # dropout_enc: identity in eval mode.
    # TODO(synk): training-mode stochastic dropout not implemented.

    # fused f_mu | f_sigma heads; head biases dropped (cancelled by affine-free BN)
    z = jnp.dot(h, w_heads, preferred_element_type=jnp.float32)      # (B, 64)
    zn = _batchnorm_train(z)                                          # pad cols -> 0, no NaN
    mu_ref[...] = zn[:, :OUTPUT_SIZE]
    ls_ref[...] = zn[:, OUTPUT_SIZE:HEAD_W]


# --------------------------------- wrapper --------------------------------
_VMEM = pl.BlockSpec(memory_space=pltpu.MemorySpace.VMEM)


def pack_params(params):
    """One-time parameter folding + packing into a single (240, 64) f32 slab."""
    (wb, bb, w0, b0, w1, b1, wmu, bmu, wsig, bsig) = params
    del bmu, bsig  # cancelled exactly by affine-free batchnorm

    w0_x = w0[:INPUT_SIZE]                                   # (32, 64)
    w0_b = w0[INPUT_SIZE:]                                   # (32, 64)
    w_in_b = wb @ w0_b                                       # (64, 64) adapt_bert folded
    b0_f = b0 + bb @ w0_b                                    # (1, 64)

    w_heads = jnp.concatenate([wmu, wsig], axis=1)           # (64, 32)
    w_heads = jnp.pad(w_heads, ((0, 0), (0, SLAB_W - HEAD_W)))  # (64, 64)

    b0_blk = jnp.broadcast_to(b0_f, (8, SLAB_W))             # pre-replicated biases
    b1_blk = jnp.broadcast_to(b1, (8, SLAB_W))

    slab = jnp.concatenate(
        [w0_x, w_in_b, w1, w_heads, b0_blk, b1_blk], axis=0).astype(jnp.float32)
    assert slab.shape == (SLAB_ROWS, SLAB_W)
    return slab


@jax.jit
def combined_inference_network(x, x_bert, slab):
    b = x.shape[0]
    flops = 2 * b * (INPUT_SIZE * H0 + BERT_SIZE * H0 + H0 * H1 + H1 * SLAB_W)
    transcendentals = 4 * b * H0     # exp + log1p per element, two softplus layers
    bytes_accessed = 4 * (slab.size + x.size + x_bert.size + 2 * b * OUTPUT_SIZE)

    mu, log_sigma = pl.pallas_call(
        inference_kernel,
        out_shape=(jax.ShapeDtypeStruct((b, OUTPUT_SIZE), jnp.float32),
                   jax.ShapeDtypeStruct((b, OUTPUT_SIZE), jnp.float32)),
        in_specs=[_VMEM, _VMEM, _VMEM],
        out_specs=(_VMEM, _VMEM),
        cost_estimate=pl.CostEstimate(
            flops=flops, transcendentals=transcendentals,
            bytes_accessed=bytes_accessed),
    )(x, x_bert, slab)
    return mu, log_sigma


# --------------------------- deterministic params --------------------------
def init_params(key):
    """PyTorch-style Linear init (uniform +/- 1/sqrt(fan_in)), weights stored (in, out)."""
    def linear(key, fan_in, fan_out):
        kw, kb = jax.random.split(key)
        bound = 1.0 / jnp.sqrt(float(fan_in))
        w = jax.random.uniform(kw, (fan_in, fan_out), jnp.float32, -bound, bound)
        b = jax.random.uniform(kb, (1, fan_out), jnp.float32, -bound, bound)
        return w, b

    keys = jax.random.split(key, 5)
    wb, bb = linear(keys[0], BERT_SIZE, INPUT_SIZE)                         # adapt_bert
    w0, b0 = linear(keys[1], 2 * INPUT_SIZE + LABEL_SIZE, HIDDEN_SIZES[0])  # input_layer
    w1, b1 = linear(keys[2], HIDDEN_SIZES[0], HIDDEN_SIZES[1])              # hiddens.l_0
    wmu, bmu = linear(keys[3], HIDDEN_SIZES[-1], OUTPUT_SIZE)               # f_mu
    wsig, bsig = linear(keys[4], HIDDEN_SIZES[-1], OUTPUT_SIZE)             # f_sigma
    return (wb, bb, w0, b0, w1, b1, wmu, bmu, wsig, bsig)


# --------------------------- pure-JAX reference ----------------------------
def reference_forward(x, x_bert, params):
    """Faithful to the PyTorch graph (no folding, biases included)."""
    (wb, bb, w0, b0, w1, b1, wmu, bmu, wsig, bsig) = params
    xb = x_bert @ wb + bb
    cat = jnp.concatenate([x, xb], axis=1)
    h = _softplus(cat @ w0 + b0)
    h = _softplus(h @ w1 + b1)
    mu = _batchnorm_train(h @ wmu + bmu)
    lsig = _batchnorm_train(h @ wsig + bsig)
    return mu, lsig


if __name__ == "__main__":
    key = jax.random.PRNGKey(0)
    kx, kb, kp = jax.random.split(key, 3)

    x = jax.random.normal(kx, (BATCH, INPUT_SIZE), jnp.float32)
    x_bert = jax.random.normal(kb, (BATCH, BERT_SIZE), jnp.float32)
    params = init_params(kp)

    slab = jax.block_until_ready(pack_params(params))        # one-time packing

    mu, log_sigma = combined_inference_network(x, x_bert, slab)
    jax.block_until_ready((mu, log_sigma))

    mu_ref, ls_ref = reference_forward(x, x_bert, params)
    assert mu.shape == (BATCH, OUTPUT_SIZE) and log_sigma.shape == (BATCH, OUTPUT_SIZE)
    assert jnp.allclose(mu, mu_ref, atol=2e-4, rtol=2e-4)
    assert jnp.allclose(log_sigma, ls_ref, atol=2e-4, rtol=2e-4)

    print("KERNEL_OK")
</pallas_src>

<mosaic_0001>
module attributes {stable_mosaic.version = 11 : i64} {
  func.func @inference_kernel(%arg0: memref<8x32xf32, #tpu.memory_space<vmem>>, %arg1: memref<8x64xf32, #tpu.memory_space<vmem>>, %arg2: memref<240x64xf32, #tpu.memory_space<vmem>>, %arg3: memref<8x16xf32, #tpu.memory_space<vmem>>, %arg4: memref<8x16xf32, #tpu.memory_space<vmem>>) attributes {dimension_semantics = [], scalar_prefetch = 0 : i64, scratch_operands = 0 : i64, tpu.core_type = #tpu.core_type<tc>} {
    %c0 = arith.constant 0 : index
    %c0_0 = arith.constant 0 : index
    %0 = vector.load %arg2[%c0, %c0_0] : memref<240x64xf32, #tpu.memory_space<vmem>>, vector<32x64xf32>
    %c32 = arith.constant 32 : index
    %c0_1 = arith.constant 0 : index
    %1 = vector.load %arg2[%c32, %c0_1] : memref<240x64xf32, #tpu.memory_space<vmem>>, vector<64x64xf32>
    %c96 = arith.constant 96 : index
    %c0_2 = arith.constant 0 : index
    %2 = vector.load %arg2[%c96, %c0_2] : memref<240x64xf32, #tpu.memory_space<vmem>>, vector<64x64xf32>
    %c160 = arith.constant 160 : index
    %c0_3 = arith.constant 0 : index
    %3 = vector.load %arg2[%c160, %c0_3] : memref<240x64xf32, #tpu.memory_space<vmem>>, vector<64x64xf32>
    %c224 = arith.constant 224 : index
    %c0_4 = arith.constant 0 : index
    %4 = vector.load %arg2[%c224, %c0_4] : memref<240x64xf32, #tpu.memory_space<vmem>>, vector<8x64xf32>
    %c232 = arith.constant 232 : index
    %c0_5 = arith.constant 0 : index
    %5 = vector.load %arg2[%c232, %c0_5] : memref<240x64xf32, #tpu.memory_space<vmem>>, vector<8x64xf32>
    %c0_6 = arith.constant 0 : index
    %c0_7 = arith.constant 0 : index
    %6 = vector.load %arg0[%c0_6, %c0_7] : memref<8x32xf32, #tpu.memory_space<vmem>>, vector<8x32xf32>
    %cst = arith.constant dense<0.000000e+00> : vector<8x64xf32>
    %7 = tpu.matmul %6, %0, %cst {dimension_numbers = #tpu.dot_dimension_numbers<[1], [0], [0], [1], [0, 0, 1, 1], [], []>} : vector<8x32xf32>, vector<32x64xf32>, vector<8x64xf32> -> vector<8x64xf32>
    %c0_8 = arith.constant 0 : index
    %c0_9 = arith.constant 0 : index
    %8 = vector.load %arg1[%c0_8, %c0_9] : memref<8x64xf32, #tpu.memory_space<vmem>>, vector<8x64xf32>
    %cst_10 = arith.constant dense<0.000000e+00> : vector<8x64xf32>
    %9 = tpu.matmul %8, %1, %cst_10 {dimension_numbers = #tpu.dot_dimension_numbers<[1], [0], [0], [1], [0, 0, 1, 1], [], []>} : vector<8x64xf32>, vector<64x64xf32>, vector<8x64xf32> -> vector<8x64xf32>
    %10 = arith.addf %7, %9 : vector<8x64xf32>
    %11 = arith.addf %10, %4 : vector<8x64xf32>
    %cst_11 = arith.constant 2.000000e+01 : f32
    %12 = vector.broadcast %cst_11 : f32 to vector<8x64xf32>
    %13 = arith.cmpf ogt, %11, %12 : vector<8x64xf32>
    %14 = math.absf %11 : vector<8x64xf32>
    %cst_12 = arith.constant 0.000000e+00 : f32
    %15 = vector.broadcast %cst_12 : f32 to vector<8x64xf32>
    %16 = arith.subf %15, %14 : vector<8x64xf32>
    %17 = math.exp %16 : vector<8x64xf32>
    %18 = math.log1p %17 : vector<8x64xf32>
    %cst_13 = arith.constant 0.000000e+00 : f32
    %19 = vector.broadcast %cst_13 : f32 to vector<8x64xf32>
    %20 = arith.maximumf %11, %19 : vector<8x64xf32>
    %21 = arith.addf %18, %20 : vector<8x64xf32>
    %22 = arith.select %13, %11, %21 : vector<8x64xi1>, vector<8x64xf32>
    %cst_14 = arith.constant dense<0.000000e+00> : vector<8x64xf32>
    %23 = tpu.matmul %22, %2, %cst_14 {dimension_numbers = #tpu.dot_dimension_numbers<[1], [0], [0], [1], [0, 0, 1, 1], [], []>} : vector<8x64xf32>, vector<64x64xf32>, vector<8x64xf32> -> vector<8x64xf32>
    %24 = arith.addf %23, %5 : vector<8x64xf32>
    %cst_15 = arith.constant 2.000000e+01 : f32
    %25 = vector.broadcast %cst_15 : f32 to vector<8x64xf32>
    %26 = arith.cmpf ogt, %24, %25 : vector<8x64xf32>
    %27 = math.absf %24 : vector<8x64xf32>
    %cst_16 = arith.constant 0.000000e+00 : f32
    %28 = vector.broadcast %cst_16 : f32 to vector<8x64xf32>
    %29 = arith.subf %28, %27 : vector<8x64xf32>
    %30 = math.exp %29 : vector<8x64xf32>
    %31 = math.log1p %30 : vector<8x64xf32>
    %cst_17 = arith.constant 0.000000e+00 : f32
    %32 = vector.broadcast %cst_17 : f32 to vector<8x64xf32>
    %33 = arith.maximumf %24, %32 : vector<8x64xf32>
    %34 = arith.addf %31, %33 : vector<8x64xf32>
    %35 = arith.select %26, %24, %34 : vector<8x64xi1>, vector<8x64xf32>
    %cst_18 = arith.constant dense<0.000000e+00> : vector<8x64xf32>
    %36 = tpu.matmul %35, %3, %cst_18 {dimension_numbers = #tpu.dot_dimension_numbers<[1], [0], [0], [1], [0, 0, 1, 1], [], []>} : vector<8x64xf32>, vector<64x64xf32>, vector<8x64xf32> -> vector<8x64xf32>
    %cst_19 = arith.constant dense<0.000000e+00> : vector<64xf32>
    %37 = vector.multi_reduction <add>, %36, %cst_19 [0] : vector<8x64xf32> to vector<64xf32>
    %38 = vector.shape_cast %37 : vector<64xf32> to vector<1x64xf32>
    %cst_20 = arith.constant 8.000000e+00 : f32
    %39 = vector.broadcast %cst_20 : f32 to vector<1x64xf32>
    %40 = arith.divf %38, %39 : vector<1x64xf32>
    %41 = vector.broadcast %40 : vector<1x64xf32> to vector<8x64xf32>
    %42 = arith.subf %36, %41 : vector<8x64xf32>
    %43 = arith.mulf %42, %42 : vector<8x64xf32>
    %cst_21 = arith.constant dense<0.000000e+00> : vector<64xf32>
    %44 = vector.multi_reduction <add>, %43, %cst_21 [0] : vector<8x64xf32> to vector<64xf32>
    %45 = vector.shape_cast %44 : vector<64xf32> to vector<1x64xf32>
    %cst_22 = arith.constant 8.000000e+00 : f32
    %46 = vector.broadcast %cst_22 : f32 to vector<1x64xf32>
    %47 = arith.divf %45, %46 : vector<1x64xf32>
    %48 = vector.broadcast %40 : vector<1x64xf32> to vector<8x64xf32>
    %49 = arith.subf %36, %48 : vector<8x64xf32>
    %cst_23 = arith.constant 9.99999974E-6 : f32
    %50 = vector.broadcast %cst_23 : f32 to vector<1x64xf32>
    %51 = arith.addf %47, %50 : vector<1x64xf32>
    %52 = math.rsqrt %51 : vector<1x64xf32>
    %53 = vector.broadcast %52 : vector<1x64xf32> to vector<8x64xf32>
    %54 = arith.mulf %49, %53 : vector<8x64xf32>
    %55 = vector.extract_strided_slice %54 {offsets = [0, 0], sizes = [8, 16], strides = [1, 1]} : vector<8x64xf32> to vector<8x16xf32>
    %c0_24 = arith.constant 0 : index
    %c0_25 = arith.constant 0 : index
    %56 = vector.load %arg3[%c0_24, %c0_25] : memref<8x16xf32, #tpu.memory_space<vmem>>, vector<8x16xf32>
    tpu.vector_store %arg3[%c0_24, %c0_25], %55 {strides = array<i32>} : memref<8x16xf32, #tpu.memory_space<vmem>>, vector<8x16xf32>,
    %57 = vector.extract_strided_slice %54 {offsets = [0, 16], sizes = [8, 16], strides = [1, 1]} : vector<8x64xf32> to vector<8x16xf32>
    %c0_26 = arith.constant 0 : index
    %c0_27 = arith.constant 0 : index
    %58 = vector.load %arg4[%c0_26, %c0_27] : memref<8x16xf32, #tpu.memory_space<vmem>>, vector<8x16xf32>
    tpu.vector_store %arg4[%c0_26, %c0_27], %57 {strides = array<i32>} : memref<8x16xf32, #tpu.memory_space<vmem>>, vector<8x16xf32>,
    return
  }
}

</mosaic_0001>

<llo_original>
// kernel: combined_inference_network.1
$region0: #{combined_inference_network.1}
  #allocation0 [shape = 'u32[]', space=smem, size = 0x4, offset = 0x4, fixed_abs, tag = 'smem constant byte address 0x4 - core index']
  #allocation1 [shape = 'u32[144,128]{1,0:T(1,128)}', space=vmem, size = 0x12000, scoped, tag = 'internal scratch']
  %s0 = inlined_call_operand.vmem [shape: f32[8,32], index: 0, kind: input, shape index: {}]
  %s1 = inlined_call_operand.vmem [shape: f32[8,64], index: 1, kind: input, shape index: {}]
  %s2 = inlined_call_operand.vmem [shape: f32[240,64], index: 2, kind: input, shape index: {}]
  %s3 = inlined_call_operand.hbm [shape: f32[8,16], index: 3, kind: output, shape index: {0}]
  %s4 = inlined_call_operand.hbm [shape: f32[8,16], index: 4, kind: output, shape index: {1}]
  %5 = xla_tuple %s3, %s4
  %s6 = sld [smem:[#allocation0]]
  $region30: #{combined_inference_network.1} parent=0
    _
  %s8 = ssub.s32 1, %s6
  %s9 = scalar_select 0, %s8, %s6
  $region1: #{combined_inference_network.1} parent=0
    #allocation2 [shape = 'u8[4096]{0}', space=vmem, size = 0x1000, scoped, tag = 'output window, operand 0, single buffered']
    #allocation3 [shape = 's32[1]{0}', space=sflag, size = 0x4, scoped, tag = 'scoped memory for combined_inference_network.1']
    #allocation4 [shape = 'u8[4096]{0}', space=vmem, size = 0x1000, scoped, tag = 'output window, operand 1, single buffered']
    #allocation5 [shape = 's32[1]{0}', space=sflag, size = 0x4, scoped, tag = 'scoped memory for combined_inference_network.1']
    %10 = vsyncpa [#allocation3], 0
    %11 = vsyncpa [#allocation5], 0
    // Predicated region
    $region2: #{combined_inference_network.1} parent=1 // pred_check
      _
    $region3: #{combined_inference_network.1} parent=1 // pred_check_branch
      %13 = sbr.rel (0) target = $region5
    $region4: #{combined_inference_network.1} parent=1 // pred_region
      _
    $region5: #{combined_inference_network.1} parent=1 // pred_fallthru
      _
    // Predicated region
    $region6: #{combined_inference_network.1} parent=1 // pred_check
      _
    $region7: #{combined_inference_network.1} parent=1 // pred_check_branch
      %15 = sbr.rel (0) target = $region9
    $region8: #{combined_inference_network.1} parent=1 // pred_region
      _
    $region9: #{combined_inference_network.1} parent=1 // pred_fallthru
      _
    // Predicated region
    $region10: #{combined_inference_network.1} parent=1 // pred_check
      _
    $region11: #{combined_inference_network.1} parent=1 // pred_check_branch
      %17 = sbr.rel (0) target = $region13
    $region12: #{combined_inference_network.1} parent=1 // pred_region
      _
    $region13: #{combined_inference_network.1} parent=1 // pred_fallthru
      _
    %v18 = vld [vmem:[%s2] sm:$0xff]
    %v19 = vld [vmem:[%s2 + $0x8] sm:$0xff]
    %v20 = vld [vmem:[%s2 + $0x10] sm:$0xff]
    %v21 = vld [vmem:[%s2 + $0x18] sm:$0xff]
    %v22 = vld [vmem:[%s2 + $0x20] sm:$0xff]
    %v23 = vld [vmem:[%s2 + $0x28] sm:$0xff]
    %v24 = vld [vmem:[%s2 + $0x30] sm:$0xff]
    %v25 = vld [vmem:[%s2 + $0x38] sm:$0xff]
    %v26 = vld [vmem:[%s2 + $0x40] sm:$0xff]
    %v27 = vld [vmem:[%s2 + $0x48] sm:$0xff]
    %v28 = vld [vmem:[%s2 + $0x50] sm:$0xff]
    %v29 = vld [vmem:[%s2 + $0x58] sm:$0xff]
    %v30 = vld [vmem:[%s2 + $0x60] sm:$0xff]
    %v31 = vld [vmem:[%s2 + $0x68] sm:$0xff]
    %v32 = vld [vmem:[%s2 + $0x70] sm:$0xff]
    %v33 = vld [vmem:[%s2 + $0x78] sm:$0xff]
    %v34 = vld [vmem:[%s2 + $0x80] sm:$0xff]
    %v35 = vld [vmem:[%s2 + $0x88] sm:$0xff]
    %v36 = vld [vmem:[%s2 + $0x90] sm:$0xff]
    %v37 = vld [vmem:[%s2 + $0x98] sm:$0xff]
    %v38 = vld [vmem:[%s2 + $0xa0] sm:$0xff]
    %v39 = vld [vmem:[%s2 + $0xa8] sm:$0xff]
    %v40 = vld [vmem:[%s2 + $0xb0] sm:$0xff]
    %v41 = vld [vmem:[%s2 + $0xb8] sm:$0xff]
    %v42 = vld [vmem:[%s2 + $0xc0] sm:$0xff]
    %v43 = vld [vmem:[%s2 + $0xc8] sm:$0xff]
    %v44 = vld [vmem:[%s2 + $0xd0] sm:$0xff]
    %v45 = vld [vmem:[%s2 + $0xd8] sm:$0xff]
    %v46 = vld [vmem:[%s2 + $0xe0] sm:$0xff]
    %v47 = vld [vmem:[%s2 + $0xe8] sm:$0xff]
    %v48 = vld [vmem:[%s0] sm:$0xff]
    %v49 = vld [vmem:[%s1] sm:$0xff]
    %vm50 = vcmask 523264
    %v52 = vsel %vm50, %v49, 0
    %54 = vmatprep.subr.mxu0 0.0
    %55 = vmatpush1.msra.mxu0 %v22
    %56 = vmatprep.subr.mxu0 0.0
    %57 = vmatpush1.msra.mxu0 %v23
    %58 = vmatprep.subr.mxu0 0.0
    %59 = vmatpush1.msra.mxu0 %v24
    %60 = vmatprep.subr.mxu0 0.0
    %61 = vmatpush1.msra.mxu0 %v25
    %62 = vmatprep.subr.mxu0 0.0
    %63 = vmatpush1.msra.mxu0 %v26
    %64 = vmatprep.subr.mxu0 0.0
    %65 = vmatpush1.msra.mxu0 %v27
    %66 = vmatprep.subr.mxu0 0.0
    %67 = vmatpush1.msra.mxu0 %v28
    %68 = vmatprep.subr.mxu0 0.0
    %69 = vmatpush1.msra.mxu0 %v29
    %70 = vmatprep.subr.mxu0 0.0
    %71 = vmatpush1.msra.mxu0 0.0
    %72 = vmatprep.subr.mxu0 0.0
    %73 = vmatpush1.msra.mxu0 0.0
    %74 = vmatprep.subr.mxu0 0.0
    %75 = vmatpush1.msra.mxu0 0.0
    %76 = vmatprep.subr.mxu0 0.0
    %77 = vmatpush1.msra.mxu0 0.0
    %78 = vmatprep.subr.mxu0 0.0
    %79 = vmatpush1.msra.mxu0 0.0
    %80 = vmatprep.subr.mxu0 0.0
    %81 = vmatpush1.msra.mxu0 0.0
    %82 = vmatprep.subr.mxu0 0.0
    %83 = vmatpush1.msra.mxu0 0.0
    %84 = vmatprep.subr.mxu0 0.0
    %85 = vmatpush1.msra.mxu0 0.0
    %86 = vmatprep.subr.mxu0 0.0
    %87 = vmatpush1.msra.mxu0 0.0
    %88 = vmatprep.subr.mxu0 0.0
    %89 = vmatpush1.msra.mxu0 0.0
    %90 = vmatprep.subr.mxu0 0.0
    %91 = vmatpush1.msra.mxu0 0.0
    %92 = vmatprep.subr.mxu0 0.0
    %93 = vmatpush1.msra.mxu0 0.0
    %94 = vmatprep.subr.mxu0 0.0
    %95 = vmatpush1.msra.mxu0 0.0
    %96 = vmatprep.subr.mxu0 0.0
    %97 = vmatpush1.msra.mxu0 0.0
    %98 = vmatprep.subr.mxu0 0.0
    %99 = vmatpush1.msra.mxu0 0.0
    %100 = vmatprep.subr.mxu0 0.0
    %101 = vmatpush1.msra.mxu0 0.0
    %102 = vmatprep.subr.mxu0 0.0
    %103 = vmatpush1.msra.mxu0 0.0
    %104 = vmatprep.subr.mxu0 0.0
    %105 = vmatpush1.msra.mxu0 0.0
    %106 = vmatprep.subr.mxu0 0.0
    %107 = vmatpush1.msra.mxu0 0.0
    %108 = vmatprep.subr.mxu0 0.0
    %109 = vmatpush1.msra.mxu0 0.0
    %110 = vmatprep.subr.mxu0 0.0
    %111 = vmatpush1.msra.mxu0 0.0
    %112 = vmatprep.subr.mxu0 0.0
    %113 = vmatpush1.msra.mxu0 0.0
    %114 = vmatprep.subr.mxu0 0.0
    %115 = vmatpush1.msra.mxu0 0.0
    %116 = vmatprep.subr.mxu0 0.0
    %117 = vmatpush1.msra.mxu0 0.0
    %118 = vmatprep.mubr.f32.mxu0 0.0
    %119 = vmatmul.mubr.f32.gmra.mrb[0].mxu0 %v52
    %v120 = vpop.f32.mrb[0].mxu0
    %v121 = vadd.f32 0.0, %v120
    %v122 = vpop.f32.mrb[0].mxu0
    %123 = vdwg.mxu0
    %vm124 = vcmask 261120
    %v126 = vsel %vm124, %v48, 0
    %128 = vmatprep.subr.mxu0 0.0
    %129 = vmatpush1.msra.mxu0 %v18
    %130 = vmatprep.subr.mxu0 0.0
    %131 = vmatpush1.msra.mxu0 %v19
    %132 = vmatprep.subr.mxu0 0.0
    %133 = vmatpush1.msra.mxu0 %v20
    %134 = vmatprep.subr.mxu0 0.0
    %135 = vmatpush1.msra.mxu0 %v21
    %136 = vmatprep.subr.mxu0 0.0
    %137 = vmatpush1.msra.mxu0 0.0
    %138 = vmatprep.subr.mxu0 0.0
    %139 = vmatpush1.msra.mxu0 0.0
    %140 = vmatprep.subr.mxu0 0.0
    %141 = vmatpush1.msra.mxu0 0.0
    %142 = vmatprep.subr.mxu0 0.0
    %143 = vmatpush1.msra.mxu0 0.0
    %144 = vmatprep.subr.mxu0 0.0
    %145 = vmatpush1.msra.mxu0 0.0
    %146 = vmatprep.subr.mxu0 0.0
    %147 = vmatpush1.msra.mxu0 0.0
    %148 = vmatprep.subr.mxu0 0.0
    %149 = vmatpush1.msra.mxu0 0.0
    %150 = vmatprep.subr.mxu0 0.0
    %151 = vmatpush1.msra.mxu0 0.0
    %152 = vmatprep.subr.mxu0 0.0
    %153 = vmatpush1.msra.mxu0 0.0
    %154 = vmatprep.subr.mxu0 0.0
    %155 = vmatpush1.msra.mxu0 0.0
    %156 = vmatprep.subr.mxu0 0.0
    %157 = vmatpush1.msra.mxu0 0.0
    %158 = vmatprep.subr.mxu0 0.0
    %159 = vmatpush1.msra.mxu0 0.0
    %160 = vmatprep.subr.mxu0 0.0
    %161 = vmatpush1.msra.mxu0 0.0
    %162 = vmatprep.subr.mxu0 0.0
    %163 = vmatpush1.msra.mxu0 0.0
    %164 = vmatprep.subr.mxu0 0.0
    %165 = vmatpush1.msra.mxu0 0.0
    %166 = vmatprep.subr.mxu0 0.0
    %167 = vmatpush1.msra.mxu0 0.0
    %168 = vmatprep.subr.mxu0 0.0
    %169 = vmatpush1.msra.mxu0 0.0
    %170 = vmatprep.subr.mxu0 0.0
    %171 = vmatpush1.msra.mxu0 0.0
    %172 = vmatprep.subr.mxu0 0.0
    %173 = vmatpush1.msra.mxu0 0.0
    %174 = vmatprep.subr.mxu0 0.0
    %175 = vmatpush1.msra.mxu0 0.0
    %176 = vmatprep.subr.mxu0 0.0
    %177 = vmatpush1.msra.mxu0 0.0
    %178 = vmatprep.subr.mxu0 0.0
    %179 = vmatpush1.msra.mxu0 0.0
    %180 = vmatprep.subr.mxu0 0.0
    %181 = vmatpush1.msra.mxu0 0.0
    %182 = vmatprep.subr.mxu0 0.0
    %183 = vmatpush1.msra.mxu0 0.0
    %184 = vmatprep.subr.mxu0 0.0
    %185 = vmatpush1.msra.mxu0 0.0
    %186 = vmatprep.subr.mxu0 0.0
    %187 = vmatpush1.msra.mxu0 0.0
    %188 = vmatprep.subr.mxu0 0.0
    %189 = vmatpush1.msra.mxu0 0.0
    %190 = vmatprep.subr.mxu0 0.0
    %191 = vmatpush1.msra.mxu0 0.0
    %192 = vmatprep.mubr.f32.mxu0 0.0
    %193 = vmatmul.mubr.f32.gmra.mrb[0].mxu0 %v126
    %v194 = vpop.f32.mrb[0].mxu0
    %v195 = vadd.f32 %v121, %v194
    %v196 = vpop.f32.mrb[0].mxu0
    %197 = vdwg.mxu0
    %v198 = vadd.f32 %v195, %v46
    %vm199 = vcmp.gt.f32.partialorder %v198, 20.0
    %v200 = vand.u32 2147483647, %v198
    %v201 = vsub.f32 0.0, %v200
    %v202 = vmul.f32 %v201, 1.442695
    %v203 = vpow.pop %v202
    %v204 = vadd.f32 %v203, 1.0
    %v205 = vlog2.pop %v204
    %v206 = vmul.f32 %v205, 0.6931472
    %v207 = vmul.f32 -0.5, %v203
    %v208 = vadd.f32 %v207, 1.0
    %v209 = vmul.f32 %v208, %v203
    %v210 = vand.u32 2147483647, %v203
    %vm211 = vcmp.lt.f32.partialorder %v210, 0.0004427343
    %v212 = vsel %vm211, %v209, %v206
    %v213 = vmax.f32 %v198, 0.0
    %v214 = vadd.f32 %v212, %v213
    %v215 = vsel %vm199, %v198, %v214
    %v217 = vsel %vm50, %v215, 0
    %219 = vmatprep.subr.mxu0 0.0
    %220 = vmatpush1.msra.mxu0 %v30
    %221 = vmatprep.subr.mxu0 0.0
    %222 = vmatpush1.msra.mxu0 %v31
    %223 = vmatprep.subr.mxu0 0.0
    %224 = vmatpush1.msra.mxu0 %v32
    %225 = vmatprep.subr.mxu0 0.0
    %226 = vmatpush1.msra.mxu0 %v33
    %227 = vmatprep.subr.mxu0 0.0
    %228 = vmatpush1.msra.mxu0 %v34
    %229 = vmatprep.subr.mxu0 0.0
    %230 = vmatpush1.msra.mxu0 %v35
    %231 = vmatprep.subr.mxu0 0.0
    %232 = vmatpush1.msra.mxu0 %v36
    %233 = vmatprep.subr.mxu0 0.0
    %234 = vmatpush1.msra.mxu0 %v37
    %235 = vmatprep.subr.mxu0 0.0
    %236 = vmatpush1.msra.mxu0 0.0
    %237 = vmatprep.subr.mxu0 0.0
    %238 = vmatpush1.msra.mxu0 0.0
    %239 = vmatprep.subr.mxu0 0.0
    %240 = vmatpush1.msra.mxu0 0.0
    %241 = vmatprep.subr.mxu0 0.0
    %242 = vmatpush1.msra.mxu0 0.0
    %243 = vmatprep.subr.mxu0 0.0
    %244 = vmatpush1.msra.mxu0 0.0
    %245 = vmatprep.subr.mxu0 0.0
    %246 = vmatpush1.msra.mxu0 0.0
    %247 = vmatprep.subr.mxu0 0.0
    %248 = vmatpush1.msra.mxu0 0.0
    %249 = vmatprep.subr.mxu0 0.0
    %250 = vmatpush1.msra.mxu0 0.0
    %251 = vmatprep.subr.mxu0 0.0
    %252 = vmatpush1.msra.mxu0 0.0
    %253 = vmatprep.subr.mxu0 0.0
    %254 = vmatpush1.msra.mxu0 0.0
    %255 = vmatprep.subr.mxu0 0.0
    %256 = vmatpush1.msra.mxu0 0.0
    %257 = vmatprep.subr.mxu0 0.0
    %258 = vmatpush1.msra.mxu0 0.0
    %259 = vmatprep.subr.mxu0 0.0
    %260 = vmatpush1.msra.mxu0 0.0
    %261 = vmatprep.subr.mxu0 0.0
    %262 = vmatpush1.msra.mxu0 0.0
    %263 = vmatprep.subr.mxu0 0.0
    %264 = vmatpush1.msra.mxu0 0.0
    %265 = vmatprep.subr.mxu0 0.0
    %266 = vmatpush1.msra.mxu0 0.0
    %267 = vmatprep.subr.mxu0 0.0
    %268 = vmatpush1.msra.mxu0 0.0
    %269 = vmatprep.subr.mxu0 0.0
    %270 = vmatpush1.msra.mxu0 0.0
    %271 = vmatprep.subr.mxu0 0.0
    %272 = vmatpush1.msra.mxu0 0.0
    %273 = vmatprep.subr.mxu0 0.0
    %274 = vmatpush1.msra.mxu0 0.0
    %275 = vmatprep.subr.mxu0 0.0
    %276 = vmatpush1.msra.mxu0 0.0
    %277 = vmatprep.subr.mxu0 0.0
    %278 = vmatpush1.msra.mxu0 0.0
    %279 = vmatprep.subr.mxu0 0.0
    %280 = vmatpush1.msra.mxu0 0.0
    %281 = vmatprep.subr.mxu0 0.0
    %282 = vmatpush1.msra.mxu0 0.0
    %283 = vmatprep.mubr.f32.mxu0 0.0
    %284 = vmatmul.mubr.f32.gmra.mrb[0].mxu0 %v217
    %v285 = vpop.f32.mrb[0].mxu0
    %v286 = vadd.f32 %v47, %v285
    %v287 = vpop.f32.mrb[0].mxu0
    %288 = vdwg.mxu0
    %vm289 = vcmp.gt.f32.partialorder %v286, 20.0
    %v290 = vand.u32 2147483647, %v286
    %v291 = vsub.f32 0.0, %v290
    %v292 = vmul.f32 %v291, 1.442695
    %v293 = vpow.pop %v292
    %v294 = vadd.f32 %v293, 1.0
    %v295 = vlog2.pop %v294
    %v296 = vmul.f32 %v295, 0.6931472
    %v297 = vmul.f32 -0.5, %v293
    %v298 = vadd.f32 %v297, 1.0
    %v299 = vmul.f32 %v298, %v293
    %v300 = vand.u32 2147483647, %v293
    %vm301 = vcmp.lt.f32.partialorder %v300, 0.0004427343
    %v302 = vsel %vm301, %v299, %v296
    %v303 = vmax.f32 %v286, 0.0
    %v304 = vadd.f32 %v302, %v303
    %v305 = vsel %vm289, %v286, %v304
    %v307 = vsel %vm50, %v305, 0
    %309 = vmatprep.subr.mxu0 0.0
    %310 = vmatpush1.msra.mxu0 %v38
    %311 = vmatprep.subr.mxu0 0.0
    %312 = vmatpush1.msra.mxu0 %v39
    %313 = vmatprep.subr.mxu0 0.0
    %314 = vmatpush1.msra.mxu0 %v40
    %315 = vmatprep.subr.mxu0 0.0
    %316 = vmatpush1.msra.mxu0 %v41
    %317 = vmatprep.subr.mxu0 0.0
    %318 = vmatpush1.msra.mxu0 %v42
    %319 = vmatprep.subr.mxu0 0.0
    %320 = vmatpush1.msra.mxu0 %v43
    %321 = vmatprep.subr.mxu0 0.0
    %322 = vmatpush1.msra.mxu0 %v44
    %323 = vmatprep.subr.mxu0 0.0
    %324 = vmatpush1.msra.mxu0 %v45
    %325 = vmatprep.subr.mxu0 0.0
    %326 = vmatpush1.msra.mxu0 0.0
    %327 = vmatprep.subr.mxu0 0.0
    %328 = vmatpush1.msra.mxu0 0.0
    %329 = vmatprep.subr.mxu0 0.0
    %330 = vmatpush1.msra.mxu0 0.0
    %331 = vmatprep.subr.mxu0 0.0
    %332 = vmatpush1.msra.mxu0 0.0
    %333 = vmatprep.subr.mxu0 0.0
    %334 = vmatpush1.msra.mxu0 0.0
    %335 = vmatprep.subr.mxu0 0.0
    %336 = vmatpush1.msra.mxu0 0.0
    %337 = vmatprep.subr.mxu0 0.0
    %338 = vmatpush1.msra.mxu0 0.0
    %339 = vmatprep.subr.mxu0 0.0
    %340 = vmatpush1.msra.mxu0 0.0
    %341 = vmatprep.subr.mxu0 0.0
    %342 = vmatpush1.msra.mxu0 0.0
    %343 = vmatprep.subr.mxu0 0.0
    %344 = vmatpush1.msra.mxu0 0.0
    %345 = vmatprep.subr.mxu0 0.0
    %346 = vmatpush1.msra.mxu0 0.0
    %347 = vmatprep.subr.mxu0 0.0
    %348 = vmatpush1.msra.mxu0 0.0
    %349 = vmatprep.subr.mxu0 0.0
    %350 = vmatpush1.msra.mxu0 0.0
    %351 = vmatprep.subr.mxu0 0.0
    %352 = vmatpush1.msra.mxu0 0.0
    %353 = vmatprep.subr.mxu0 0.0
    %354 = vmatpush1.msra.mxu0 0.0
    %355 = vmatprep.subr.mxu0 0.0
    %356 = vmatpush1.msra.mxu0 0.0
    %357 = vmatprep.subr.mxu0 0.0
    %358 = vmatpush1.msra.mxu0 0.0
    %359 = vmatprep.subr.mxu0 0.0
    %360 = vmatpush1.msra.mxu0 0.0
    %361 = vmatprep.subr.mxu0 0.0
    %362 = vmatpush1.msra.mxu0 0.0
    %363 = vmatprep.subr.mxu0 0.0
    %364 = vmatpush1.msra.mxu0 0.0
    %365 = vmatprep.subr.mxu0 0.0
    %366 = vmatpush1.msra.mxu0 0.0
    %367 = vmatprep.subr.mxu0 0.0
    %368 = vmatpush1.msra.mxu0 0.0
    %369 = vmatprep.subr.mxu0 0.0
    %370 = vmatpush1.msra.mxu0 0.0
    %371 = vmatprep.subr.mxu0 0.0
    %372 = vmatpush1.msra.mxu0 0.0
    %373 = vmatprep.mubr.f32.mxu0 0.0
    %374 = vmatmul.mubr.f32.gmra.mrb[0].mxu0 %v307
    %v375 = vpop.f32.mrb[0].mxu0
    %v376 = vadd.f32 0.0, %v375
    %v377 = vpop.f32.mrb[0].mxu0
    %378 = vdwg.mxu0
    %v379 = vsel %vm50, %v376, 0.0
    %v380 = vrot.slane %v379, 4
    %v381 = vadd.f32 %v379, %v380
    %v382 = vrot.slane %v381, 2
    %v383 = vadd.f32 %v381, %v382
    %v384 = vrot.slane %v383, 1
    %v385 = vadd.f32 %v383, %v384
    %v386 = vrcp.pop 8.0
    %v387 = vmul.f32 %v385, %v386
    %v388 = vsub.f32 %v376, %v387
    %v389 = vmul.f32 %v388, %v388
    %v390 = vsel %vm50, %v389, 0.0
    %v391 = vrot.slane %v390, 4
    %v392 = vadd.f32 %v390, %v391
    %v393 = vrot.slane %v392, 2
    %v394 = vadd.f32 %v392, %v393
    %v395 = vrot.slane %v394, 1
    %v396 = vadd.f32 %v394, %v395
    %v397 = vmul.f32 %v396, %v386
    %v398 = vadd.f32 %v397, 1e-05
    %v399 = vrsqrt.pop %v398
    %v400 = vmul.f32 %v388, %v399
    %vm401 = vcmask 130048
    %402 = vst.msk [vmem:[#allocation2] sm:$0xff] %vm401, %v400
    %404 = vrot.lane.b32.xlu0 %v400, 112
    %v405 = vpop.permute.xlu0 %404
    %407 = vst.msk [vmem:[#allocation4] sm:$0xff] %vm401, %v405
    // Predicated region
    $region14: #{combined_inference_network.1} parent=1 // pred_check
      _
    $region15: #{combined_inference_network.1} parent=1 // pred_check_branch
      %409 = sbr.rel (0) target = $region17
    $region16: #{combined_inference_network.1} parent=1 // pred_region
      %s411 = ssub.s32 128, 128
      %412 = vsyncadd [#allocation3], %s411
      %s414 = sshll.u32 [#allocation2], 4
      %s415 = int_to_ptr.vmem [resolvable:$true] %s414
      %417 = dma.vmem_to_hbm [thread:$0]  %s415, 128, %s3, [#allocation3]
    $region17: #{combined_inference_network.1} parent=1 // pred_fallthru
      _
    // Predicated region
    $region18: #{combined_inference_network.1} parent=1 // pred_check
      _
    $region19: #{combined_inference_network.1} parent=1 // pred_check_branch
      %419 = sbr.rel (0) target = $region21
    $region20: #{combined_inference_network.1} parent=1 // pred_region
      %s421 = ssub.s32 128, 128
      %422 = vsyncadd [#allocation5], %s421
      %s424 = sshll.u32 [#allocation4], 4
      %s425 = int_to_ptr.vmem [resolvable:$true] %s424
      %427 = dma.vmem_to_hbm [thread:$0]  %s425, 128, %s4, [#allocation5]
    $region21: #{combined_inference_network.1} parent=1 // pred_fallthru
      _
    // Predicated region
    $region22: #{combined_inference_network.1} parent=1 // pred_check
      _
    $region23: #{combined_inference_network.1} parent=1 // pred_check_branch
      %429 = sbr.rel (0) target = $region25
    $region24: #{combined_inference_network.1} parent=1 // pred_region
      %430 = dma.done [#allocation3], 128
    $region25: #{combined_inference_network.1} parent=1 // pred_fallthru
      _
    // Predicated region
    $region26: #{combined_inference_network.1} parent=1 // pred_check
      _
    $region27: #{combined_inference_network.1} parent=1 // pred_check_branch
      %432 = sbr.rel (0) target = $region29
    $region28: #{combined_inference_network.1} parent=1 // pred_region
      %433 = dma.done [#allocation5], 128
    $region29: #{combined_inference_network.1} parent=1 // pred_fallthru
      _
    %434 = vsyncpa [#allocation3], 1
    %435 = vsyncpa [#allocation5], 1

</llo_original>
